<compile_context>
chip_gen: v7x
topology: tpu7x:2x2x1
jax: 0.10.0
libtpu: 0.0.40
codegen_flags: <defaults>
</compile_context>

<pallas_src>
import functools

import jax
import jax.numpy as jnp
from jax.experimental import pallas as pl
from jax.experimental.pallas import tpu as pltpu

_SUBLANE = 8  # f32 sublane granularity for the batch (second-to-last) dim


def _round_up(x: int, m: int) -> int:
    return (x + m - 1) // m * m


def mlp_kernel(x_ref, w1_ref, b1_ref, w2_ref, b2_ref, o_ref):
    # Hidden layer: MXU matmul with f32 accumulation; bias add + ReLU stay in
    # f32 (exact, and v5e's VPU/EUP have no bf16 support anyway).
    h = jnp.dot(x_ref[...], w1_ref[...], preferred_element_type=jnp.float32)
    h = jnp.maximum(h + b1_ref[...], 0.0)
    # Output layer: DOUT left unpadded (10 lanes) -> masked store, minimal HBM
    # writeback.  Cast the activations to the weights' MXU dtype for the dot.
    o = jnp.dot(h.astype(w2_ref.dtype), w2_ref[...],
                preferred_element_type=jnp.float32)
    o_ref[...] = (o + b2_ref[...]).astype(o_ref.dtype)


def prepare_params(w1, b1, w2, b2, *, use_bf16_weights=False):
    """One-time parameter prep (cast/reshape) — call at init, not per forward."""
    wdt = jnp.bfloat16 if use_bf16_weights else jnp.float32
    return (jnp.asarray(w1).astype(wdt),
            jnp.asarray(b1, jnp.float32).reshape(1, -1),
            jnp.asarray(w2).astype(wdt),
            jnp.asarray(b2, jnp.float32).reshape(1, -1))


@functools.partial(jax.jit, static_argnames=("tile_m",))
def my_sequential_forward(x, w1, b1, w2, b2, *, tile_m=512):
    B, DIN = x.shape
    DH = w1.shape[1]
    DOUT = w2.shape[1]

    # Batch-row padding only (zero rows are exact and sliced away below).
    b_p = _round_up(B, _SUBLANE)
    tm = min(tile_m, b_p)
    # v7x megacore: ensure >= 2 grid steps whenever the batch is big enough to
    # split, so both TensorCores get work under dimension_semantics="parallel".
    if b_p > _SUBLANE and b_p // tm < 2:
        tm = max(_SUBLANE, _round_up(b_p // 2, _SUBLANE))
    b_p = _round_up(b_p, tm)

    # Cast x once to the weights' MXU dtype (bf16 on v6e/v7x), then pad rows.
    if b_p == B:
        xp = x.astype(w1.dtype)
    else:
        xp = jnp.zeros((b_p, DIN), w1.dtype).at[:B, :].set(x.astype(w1.dtype))

    vmem = pltpu.MemorySpace.VMEM
    grid = (b_p // tm,)

    cost = pl.CostEstimate(
        flops=2 * b_p * (DIN * DH + DH * DOUT),
        transcendentals=0,
        bytes_accessed=(xp.size * xp.dtype.itemsize
                        + b_p * DOUT * 4
                        + w1.size * w1.dtype.itemsize
                        + w2.size * w2.dtype.itemsize
                        + b1.size * 4 + b2.size * 4),
    )

    out = pl.pallas_call(
        mlp_kernel,
        out_shape=jax.ShapeDtypeStruct((b_p, DOUT), jnp.float32),
        grid=grid,
        in_specs=[
            # x tile: one batch slab per grid step (last dim = full extent).
            pl.BlockSpec((tm, DIN), lambda i: (i, 0), memory_space=vmem),
            # Weights / biases: same block every step -> stay VMEM-resident.
            pl.BlockSpec((DIN, DH), lambda i: (0, 0), memory_space=vmem),
            pl.BlockSpec((1, DH), lambda i: (0, 0), memory_space=vmem),
            pl.BlockSpec((DH, DOUT), lambda i: (0, 0), memory_space=vmem),
            pl.BlockSpec((1, DOUT), lambda i: (0, 0), memory_space=vmem),
        ],
        out_specs=pl.BlockSpec((tm, DOUT), lambda i: (i, 0),
                               memory_space=vmem),
        compiler_params=pltpu.CompilerParams(
            dimension_semantics=("parallel",)),
        cost_estimate=cost,
    )(xp, w1, b1, w2, b2)

    return out[:B, :]


def init_params(key, d_in=20, d_hidden=256, d_out=10):
    # Deterministic init mimicking nn.Linear: U(-1/sqrt(fan_in), 1/sqrt(fan_in)).
    k1, k2, k3, k4 = jax.random.split(key, 4)
    lim1 = 1.0 / jnp.sqrt(jnp.float32(d_in))
    lim2 = 1.0 / jnp.sqrt(jnp.float32(d_hidden))
    w1 = jax.random.uniform(k1, (d_in, d_hidden), jnp.float32, -lim1, lim1)
    b1 = jax.random.uniform(k2, (1, d_hidden), jnp.float32, -lim1, lim1)
    w2 = jax.random.uniform(k3, (d_hidden, d_out), jnp.float32, -lim2, lim2)
    b2 = jax.random.uniform(k4, (1, d_out), jnp.float32, -lim2, lim2)
    return w1, b1, w2, b2


if __name__ == "__main__":
    key = jax.random.PRNGKey(0)
    kx, kp, kbig = jax.random.split(key, 3)

    # X = torch.rand(2, 20)  -> uniform [0, 1)
    x = jax.random.uniform(kx, (2, 20), jnp.float32)
    w1, b1, w2, b2 = init_params(kp)
    ref = jnp.maximum(x @ w1 + b1, 0.0) @ w2 + b2

    # f32 path: exact, tight tolerance.
    p32 = prepare_params(w1, b1, w2, b2, use_bf16_weights=False)
    out32 = jax.block_until_ready(my_sequential_forward(x, *p32))
    assert out32.shape == (2, 10)
    assert jnp.allclose(out32, ref, atol=1e-5, rtol=1e-5)

    # bf16 MXU-operand path (recommended default on v6e/v7x): f32 accumulation,
    # so only input quantization error -> relaxed tolerance.
    pbf = prepare_params(w1, b1, w2, b2, use_bf16_weights=True)
    outbf = jax.block_until_ready(my_sequential_forward(x, *pbf))
    assert outbf.shape == (2, 10)
    assert jnp.allclose(outbf, ref, atol=5e-2, rtol=5e-2)

    # Larger batch exercises the multi-step batch grid (>=2 steps so both v7x
    # TensorCores engage) and the row-padding path.
    x_big = jax.random.uniform(kbig, (1000, 20), jnp.float32)
    ref_big = jnp.maximum(x_big @ w1 + b1, 0.0) @ w2 + b2
    out_big = jax.block_until_ready(my_sequential_forward(x_big, *p32))
    assert out_big.shape == (1000, 10)
    assert jnp.allclose(out_big, ref_big, atol=1e-5, rtol=1e-5)

    print("KERNEL_OK")
</pallas_src>

<mosaic_0001>
module attributes {stable_mosaic.version = 11 : i64} {
  func.func @mlp_kernel(%arg0: i32, %arg1: memref<8x20xf32, #tpu.memory_space<vmem>>, %arg2: memref<20x256xf32, #tpu.memory_space<vmem>>, %arg3: memref<1x256xf32, #tpu.memory_space<vmem>>, %arg4: memref<256x10xf32, #tpu.memory_space<vmem>>, %arg5: memref<1x10xf32, #tpu.memory_space<vmem>>, %arg6: memref<8x10xf32, #tpu.memory_space<vmem>>) attributes {dimension_semantics = [#tpu.dimension_semantics<parallel>], iteration_bounds = array<i64: 1>, scalar_prefetch = 0 : i64, scratch_operands = 0 : i64, tpu.core_type = #tpu.core_type<tc>, window_params = [{transform_indices = @transform_0, window_bounds = array<i64: 8, 20>}, {pipeline_mode = #tpu.pipeline_mode<synchronous>, transform_indices = @transform_1, window_bounds = array<i64: 20, 256>}, {pipeline_mode = #tpu.pipeline_mode<synchronous>, transform_indices = @transform_2, window_bounds = array<i64: 1, 256>}, {pipeline_mode = #tpu.pipeline_mode<synchronous>, transform_indices = @transform_3, window_bounds = array<i64: 256, 10>}, {pipeline_mode = #tpu.pipeline_mode<synchronous>, transform_indices = @transform_4, window_bounds = array<i64: 1, 10>}, {transform_indices = @transform_5, window_bounds = array<i64: 8, 10>}]} {
    %c0 = arith.constant 0 : index
    %c0_0 = arith.constant 0 : index
    %0 = vector.load %arg1[%c0, %c0_0] : memref<8x20xf32, #tpu.memory_space<vmem>>, vector<8x20xf32>
    %c0_1 = arith.constant 0 : index
    %c0_2 = arith.constant 0 : index
    %1 = vector.load %arg2[%c0_1, %c0_2] : memref<20x256xf32, #tpu.memory_space<vmem>>, vector<20x256xf32>
    %cst = arith.constant dense<0.000000e+00> : vector<8x256xf32>
    %2 = tpu.matmul %0, %1, %cst {dimension_numbers = #tpu.dot_dimension_numbers<[1], [0], [0], [1], [0, 0, 1, 1], [], []>} : vector<8x20xf32>, vector<20x256xf32>, vector<8x256xf32> -> vector<8x256xf32>
    %c0_3 = arith.constant 0 : index
    %c0_4 = arith.constant 0 : index
    %3 = vector.load %arg3[%c0_3, %c0_4] : memref<1x256xf32, #tpu.memory_space<vmem>>, vector<1x256xf32>
    %4 = vector.broadcast %3 : vector<1x256xf32> to vector<8x256xf32>
    %5 = arith.addf %2, %4 : vector<8x256xf32>
    %cst_5 = arith.constant 0.000000e+00 : f32
    %6 = vector.broadcast %cst_5 : f32 to vector<8x256xf32>
    %7 = arith.maximumf %5, %6 : vector<8x256xf32>
    %c0_6 = arith.constant 0 : index
    %c0_7 = arith.constant 0 : index
    %8 = vector.load %arg4[%c0_6, %c0_7] : memref<256x10xf32, #tpu.memory_space<vmem>>, vector<256x10xf32>
    %cst_8 = arith.constant dense<0.000000e+00> : vector<8x10xf32>
    %9 = tpu.matmul %7, %8, %cst_8 {dimension_numbers = #tpu.dot_dimension_numbers<[1], [0], [0], [1], [0, 0, 1, 1], [], []>} : vector<8x256xf32>, vector<256x10xf32>, vector<8x10xf32> -> vector<8x10xf32>
    %c0_9 = arith.constant 0 : index
    %c0_10 = arith.constant 0 : index
    %10 = vector.load %arg5[%c0_9, %c0_10] : memref<1x10xf32, #tpu.memory_space<vmem>>, vector<1x10xf32>
    %11 = vector.broadcast %10 : vector<1x10xf32> to vector<8x10xf32>
    %12 = arith.addf %9, %11 : vector<8x10xf32>
    %c0_11 = arith.constant 0 : index
    %c0_12 = arith.constant 0 : index
    %13 = vector.load %arg6[%c0_11, %c0_12] : memref<8x10xf32, #tpu.memory_space<vmem>>, vector<8x10xf32>
    tpu.vector_store %arg6[%c0_11, %c0_12], %12 {strides = array<i32>} : memref<8x10xf32, #tpu.memory_space<vmem>>, vector<8x10xf32>,
    return
  }
  func.func @transform_0(%arg0: i32) -> (i32, i32) {
    %c0_i32 = arith.constant 0 : i32
    %c0_i32_0 = arith.constant 0 : i32
    return %arg0, %c0_i32 : i32, i32
  }
  func.func @transform_1(%arg0: i32) -> (i32, i32) {
    %c0_i32 = arith.constant 0 : i32
    %c0_i32_0 = arith.constant 0 : i32
    %c0_i32_1 = arith.constant 0 : i32
    return %c0_i32, %c0_i32_0 : i32, i32
  }
  func.func @transform_2(%arg0: i32) -> (i32, i32) {
    %c0_i32 = arith.constant 0 : i32
    %c0_i32_0 = arith.constant 0 : i32
    %c0_i32_1 = arith.constant 0 : i32
    return %c0_i32, %c0_i32_0 : i32, i32
  }
  func.func @transform_3(%arg0: i32) -> (i32, i32) {
    %c0_i32 = arith.constant 0 : i32
    %c0_i32_0 = arith.constant 0 : i32
    %c0_i32_1 = arith.constant 0 : i32
    return %c0_i32, %c0_i32_0 : i32, i32
  }
  func.func @transform_4(%arg0: i32) -> (i32, i32) {
    %c0_i32 = arith.constant 0 : i32
    %c0_i32_0 = arith.constant 0 : i32
    %c0_i32_1 = arith.constant 0 : i32
    return %c0_i32, %c0_i32_0 : i32, i32
  }
  func.func @transform_5(%arg0: i32) -> (i32, i32) {
    %c0_i32 = arith.constant 0 : i32
    %c0_i32_0 = arith.constant 0 : i32
    return %arg0, %c0_i32 : i32, i32
  }
}

</mosaic_0001>

<llo_original>
// kernel: my_sequential_forward.1
$region0: #{my_sequential_forward.1}
  #allocation0 [shape = 'u32[]', space=smem, size = 0x4, offset = 0x4, fixed_abs, tag = 'smem constant byte address 0x4 - core index']
  #allocation1 [shape = 'u32[144,128]{1,0:T(1,128)}', space=vmem, size = 0x12000, scoped, tag = 'internal scratch']
  %s0 = inlined_call_operand.vmem [shape: f32[8,20], index: 0, kind: input, shape index: {}]
  %s1 = inlined_call_operand.vmem [shape: f32[20,256], index: 1, kind: input, shape index: {}]
  %s2 = inlined_call_operand.vmem [shape: f32[1,256], index: 2, kind: input, shape index: {}]
  %s3 = inlined_call_operand.vmem [shape: f32[256,10], index: 3, kind: input, shape index: {}]
  %s4 = inlined_call_operand.vmem [shape: f32[1,10], index: 4, kind: input, shape index: {}]
  %s5 = inlined_call_operand.vmem [shape: f32[8,10], index: 5, kind: output, shape index: {}]
  %s6 = sld [smem:[#allocation0]]
  $region30: #{my_sequential_forward.1} parent=0
    _
  %s8 = ssub.s32 1, %s6
  %s9 = scalar_select 0, %s8, %s6
  // Predicated region
  $region2: #{my_sequential_forward.1} parent=0 // pred_check
    _
  $region3: #{my_sequential_forward.1} parent=0 // pred_check_branch
    %11 = sbr.rel (0) target = $region5
  $region4: #{my_sequential_forward.1} parent=0 // pred_region
    _
  $region5: #{my_sequential_forward.1} parent=0 // pred_fallthru
    _
  // Predicated region
  $region6: #{my_sequential_forward.1} parent=0 // pred_check
    _
  $region7: #{my_sequential_forward.1} parent=0 // pred_check_branch
    %13 = sbr.rel (0) target = $region9
  $region8: #{my_sequential_forward.1} parent=0 // pred_region
    _
  $region9: #{my_sequential_forward.1} parent=0 // pred_fallthru
    _
  // Predicated region
  $region10: #{my_sequential_forward.1} parent=0 // pred_check
    _
  $region11: #{my_sequential_forward.1} parent=0 // pred_check_branch
    %15 = sbr.rel (0) target = $region13
  $region12: #{my_sequential_forward.1} parent=0 // pred_region
    _
  $region13: #{my_sequential_forward.1} parent=0 // pred_fallthru
    _
  // Predicated region
  $region14: #{my_sequential_forward.1} parent=0 // pred_check
    _
  $region15: #{my_sequential_forward.1} parent=0 // pred_check_branch
    %17 = sbr.rel (0) target = $region17
  $region16: #{my_sequential_forward.1} parent=0 // pred_region
    _
  $region17: #{my_sequential_forward.1} parent=0 // pred_fallthru
    _
  // Predicated region
  $region18: #{my_sequential_forward.1} parent=0 // pred_check
    _
  $region19: #{my_sequential_forward.1} parent=0 // pred_check_branch
    %19 = sbr.rel (0) target = $region21
  $region20: #{my_sequential_forward.1} parent=0 // pred_region
    _
  $region21: #{my_sequential_forward.1} parent=0 // pred_fallthru
    _
  %v20 = vld [vmem:[%s0] sm:$0xff]
  %v21 = vld [vmem:[%s1] sm:$0xff]
  %v22 = vld [vmem:[%s1 + $0x8] sm:$0xff]
  %v23 = vld [vmem:[%s1 + $0x10] sm:$0xff]
  %v24 = vld [vmem:[%s1 + $0x18] sm:$0xff]
  %v25 = vld [vmem:[%s1 + $0x20] sm:$0xf]
  %v26 = vld [vmem:[%s1 + $0x28] sm:$0xf]
  %v27 = vld [vmem:[%s2] sm:$0x3]
  %v29 = vlaneseq
  %v30 = vshrl.u32 %v29, 7
  %v31 = vsub.s32 0, %v30
  %v32 = vrot.slane %v27, %v31
  %v33 = vlaneseq
  %v34 = vshrl.u32 %v33, 7
  %v35 = vsub.s32 1, %v34
  %v36 = vrot.slane %v27, %v35
  %vm39 = vcmask 162816
  %v41 = vsel %vm39, %v20, 0
  %vm43 = vcmask 1043456
  %v45 = vsel %vm43, %v25, 0
  %v48 = vsel %vm43, %v26, 0
  %50 = vmatprep.subr.mxu0 %v22
  %51 = vmatpush1.msra.mxu0 %v21
  %52 = vmatprep.subr.mxu0 %v24
  %53 = vmatpush1.msra.mxu0 %v23
  %54 = vmatprep.subr.mxu0 %v48
  %55 = vmatpush1.msra.mxu0 %v45
  %56 = vmatprep.subr.mxu0 0.0
  %57 = vmatpush1.msra.mxu0 0.0
  %58 = vmatprep.subr.mxu0 0.0
  %59 = vmatpush1.msra.mxu0 0.0
  %60 = vmatprep.subr.mxu0 0.0
  %61 = vmatpush1.msra.mxu0 0.0
  %62 = vmatprep.subr.mxu0 0.0
  %63 = vmatpush1.msra.mxu0 0.0
  %64 = vmatprep.subr.mxu0 0.0
  %65 = vmatpush1.msra.mxu0 0.0
  %66 = vmatprep.subr.mxu0 0.0
  %67 = vmatpush1.msra.mxu0 0.0
  %68 = vmatprep.subr.mxu0 0.0
  %69 = vmatpush1.msra.mxu0 0.0
  %70 = vmatprep.subr.mxu0 0.0
  %71 = vmatpush1.msra.mxu0 0.0
  %72 = vmatprep.subr.mxu0 0.0
  %73 = vmatpush1.msra.mxu0 0.0
  %74 = vmatprep.subr.mxu0 0.0
  %75 = vmatpush1.msra.mxu0 0.0
  %76 = vmatprep.subr.mxu0 0.0
  %77 = vmatpush1.msra.mxu0 0.0
  %78 = vmatprep.subr.mxu0 0.0
  %79 = vmatpush1.msra.mxu0 0.0
  %80 = vmatprep.subr.mxu0 0.0
  %81 = vmatpush1.msra.mxu0 0.0
  %82 = vmatprep.subr.mxu0 0.0
  %83 = vmatpush1.msra.mxu0 0.0
  %84 = vmatprep.subr.mxu0 0.0
  %85 = vmatpush1.msra.mxu0 0.0
  %86 = vmatprep.subr.mxu0 0.0
  %87 = vmatpush1.msra.mxu0 0.0
  %88 = vmatprep.subr.mxu0 0.0
  %89 = vmatpush1.msra.mxu0 0.0
  %90 = vmatprep.subr.mxu0 0.0
  %91 = vmatpush1.msra.mxu0 0.0
  %92 = vmatprep.subr.mxu0 0.0
  %93 = vmatpush1.msra.mxu0 0.0
  %94 = vmatprep.subr.mxu0 0.0
  %95 = vmatpush1.msra.mxu0 0.0
  %96 = vmatprep.subr.mxu0 0.0
  %97 = vmatpush1.msra.mxu0 0.0
  %98 = vmatprep.subr.mxu0 0.0
  %99 = vmatpush1.msra.mxu0 0.0
  %100 = vmatprep.subr.mxu0 0.0
  %101 = vmatpush1.msra.mxu0 0.0
  %102 = vmatprep.subr.mxu0 0.0
  %103 = vmatpush1.msra.mxu0 0.0
  %104 = vmatprep.subr.mxu0 0.0
  %105 = vmatpush1.msra.mxu0 0.0
  %106 = vmatprep.subr.mxu0 0.0
  %107 = vmatpush1.msra.mxu0 0.0
  %108 = vmatprep.subr.mxu0 0.0
  %109 = vmatpush1.msra.mxu0 0.0
  %110 = vmatprep.subr.mxu0 0.0
  %111 = vmatpush1.msra.mxu0 0.0
  %112 = vmatprep.subr.mxu0 0.0
  %113 = vmatpush1.msra.mxu0 0.0
  %114 = vmatprep.mubr.f32.mxu0 0.0
  %115 = vmatmul.mubr.f32.gmra.mrb[0].mxu0 %v41
  %v116 = vpop.f32.mrb[0].mxu0
  %v117 = vadd.f32 %v32, %v116
  %v118 = vpop.f32.mrb[0].mxu0
  %v119 = vadd.f32 %v36, %v118
  %120 = vdwg.mxu0
  %v121 = vmax.f32 %v117, 0.0
  %v122 = vmax.f32 %v119, 0.0
  %v123 = vld [vmem:[%s3] sm:$0xff]
  %v124 = vld [vmem:[%s3 + $0x8] sm:$0xff]
  %v125 = vld [vmem:[%s3 + $0x10] sm:$0xff]
  %v126 = vld [vmem:[%s3 + $0x18] sm:$0xff]
  %v127 = vld [vmem:[%s3 + $0x20] sm:$0xff]
  %v128 = vld [vmem:[%s3 + $0x28] sm:$0xff]
  %v129 = vld [vmem:[%s3 + $0x30] sm:$0xff]
  %v130 = vld [vmem:[%s3 + $0x38] sm:$0xff]
  %v131 = vld [vmem:[%s3 + $0x40] sm:$0xff]
  %v132 = vld [vmem:[%s3 + $0x48] sm:$0xff]
  %v133 = vld [vmem:[%s3 + $0x50] sm:$0xff]
  %v134 = vld [vmem:[%s3 + $0x58] sm:$0xff]
  %v135 = vld [vmem:[%s3 + $0x60] sm:$0xff]
  %v136 = vld [vmem:[%s3 + $0x68] sm:$0xff]
  %v137 = vld [vmem:[%s3 + $0x70] sm:$0xff]
  %v138 = vld [vmem:[%s3 + $0x78] sm:$0xff]
  %v139 = vld [vmem:[%s3 + $0x80] sm:$0xff]
  %v140 = vld [vmem:[%s3 + $0x88] sm:$0xff]
  %v141 = vld [vmem:[%s3 + $0x90] sm:$0xff]
  %v142 = vld [vmem:[%s3 + $0x98] sm:$0xff]
  %v143 = vld [vmem:[%s3 + $0xa0] sm:$0xff]
  %v144 = vld [vmem:[%s3 + $0xa8] sm:$0xff]
  %v145 = vld [vmem:[%s3 + $0xb0] sm:$0xff]
  %v146 = vld [vmem:[%s3 + $0xb8] sm:$0xff]
  %v147 = vld [vmem:[%s3 + $0xc0] sm:$0xff]
  %v148 = vld [vmem:[%s3 + $0xc8] sm:$0xff]
  %v149 = vld [vmem:[%s3 + $0xd0] sm:$0xff]
  %v150 = vld [vmem:[%s3 + $0xd8] sm:$0xff]
  %v151 = vld [vmem:[%s3 + $0xe0] sm:$0xff]
  %v152 = vld [vmem:[%s3 + $0xe8] sm:$0xff]
  %v153 = vld [vmem:[%s3 + $0xf0] sm:$0xff]
  %v154 = vld [vmem:[%s3 + $0xf8] sm:$0xff]
  %v155 = vld [vmem:[%s4] sm:$0x1]
  %v157 = vlaneseq
  %v158 = vshrl.u32 %v157, 7
  %v159 = vsub.s32 0, %v158
  %v160 = vrot.slane %v155, %v159
  %162 = vmatprep.subr.mxu0 0.0
  %163 = vmatpush1.msra.mxu0 %v123
  %164 = vmatprep.subr.mxu0 0.0
  %165 = vmatpush1.msra.mxu0 %v124
  %166 = vmatprep.subr.mxu0 0.0
  %167 = vmatpush1.msra.mxu0 %v125
  %168 = vmatprep.subr.mxu0 0.0
  %169 = vmatpush1.msra.mxu0 %v126
  %170 = vmatprep.subr.mxu0 0.0
  %171 = vmatpush1.msra.mxu0 %v127
  %172 = vmatprep.subr.mxu0 0.0
  %173 = vmatpush1.msra.mxu0 %v128
  %174 = vmatprep.subr.mxu0 0.0
  %175 = vmatpush1.msra.mxu0 %v129
  %176 = vmatprep.subr.mxu0 0.0
  %177 = vmatpush1.msra.mxu0 %v130
  %178 = vmatprep.subr.mxu0 0.0
  %179 = vmatpush1.msra.mxu0 %v131
  %180 = vmatprep.subr.mxu0 0.0
  %181 = vmatpush1.msra.mxu0 %v132
  %182 = vmatprep.subr.mxu0 0.0
  %183 = vmatpush1.msra.mxu0 %v133
  %184 = vmatprep.subr.mxu0 0.0
  %185 = vmatpush1.msra.mxu0 %v134
  %186 = vmatprep.subr.mxu0 0.0
  %187 = vmatpush1.msra.mxu0 %v135
  %188 = vmatprep.subr.mxu0 0.0
  %189 = vmatpush1.msra.mxu0 %v136
  %190 = vmatprep.subr.mxu0 0.0
  %191 = vmatpush1.msra.mxu0 %v137
  %192 = vmatprep.subr.mxu0 0.0
  %193 = vmatpush1.msra.mxu0 %v138
  %194 = vmatprep.subr.mxu0 0.0
  %195 = vmatpush1.msra.mxu0 %v139
  %196 = vmatprep.subr.mxu0 0.0
  %197 = vmatpush1.msra.mxu0 %v140
  %198 = vmatprep.subr.mxu0 0.0
  %199 = vmatpush1.msra.mxu0 %v141
  %200 = vmatprep.subr.mxu0 0.0
  %201 = vmatpush1.msra.mxu0 %v142
  %202 = vmatprep.subr.mxu0 0.0
  %203 = vmatpush1.msra.mxu0 %v143
  %204 = vmatprep.subr.mxu0 0.0
  %205 = vmatpush1.msra.mxu0 %v144
  %206 = vmatprep.subr.mxu0 0.0
  %207 = vmatpush1.msra.mxu0 %v145
  %208 = vmatprep.subr.mxu0 0.0
  %209 = vmatpush1.msra.mxu0 %v146
  %210 = vmatprep.subr.mxu0 0.0
  %211 = vmatpush1.msra.mxu0 %v147
  %212 = vmatprep.subr.mxu0 0.0
  %213 = vmatpush1.msra.mxu0 %v148
  %214 = vmatprep.subr.mxu0 0.0
  %215 = vmatpush1.msra.mxu0 %v149
  %216 = vmatprep.subr.mxu0 0.0
  %217 = vmatpush1.msra.mxu0 %v150
  %218 = vmatprep.subr.mxu0 0.0
  %219 = vmatpush1.msra.mxu0 %v151
  %220 = vmatprep.subr.mxu0 0.0
  %221 = vmatpush1.msra.mxu0 %v152
  %222 = vmatprep.subr.mxu0 0.0
  %223 = vmatpush1.msra.mxu0 %v153
  %224 = vmatprep.subr.mxu0 0.0
  %225 = vmatpush1.msra.mxu0 %v154
  %226 = vmatprep.mubr.f32.mxu0 %v122
  %227 = vmatmul.mubr.f32.gmra.mrb[0].mxu0 %v121
  %v228 = vpop.f32.mrb[0].mxu0
  %v229 = vadd.f32 %v160, %v228
  %v230 = vpop.f32.mrb[0].mxu0
  %231 = vdwg.mxu0
  %vm232 = vcmask 80896
  %233 = vst.msk [vmem:[%s5] sm:$0xff] %vm232, %v229
  // Predicated region
  $region22: #{my_sequential_forward.1} parent=0 // pred_check
    _
  $region23: #{my_sequential_forward.1} parent=0 // pred_check_branch
    %235 = sbr.rel (0) target = $region25
  $region24: #{my_sequential_forward.1} parent=0 // pred_region
    _
  $region25: #{my_sequential_forward.1} parent=0 // pred_fallthru
    _
  // Predicated region
  $region26: #{my_sequential_forward.1} parent=0 // pred_check
    _
  $region27: #{my_sequential_forward.1} parent=0 // pred_check_branch
    %237 = sbr.rel (0) target = $region29
  $region28: #{my_sequential_forward.1} parent=0 // pred_region
    _
  $region29: #{my_sequential_forward.1} parent=0 // pred_fallthru
    _

</llo_original>
